<compile_context>
chip_gen: v5e
topology: v5e:2x2
jax: 0.10.0
libtpu: 0.0.40
codegen_flags: <defaults>
</compile_context>

<pallas_src>
import functools

import jax
import jax.numpy as jnp
import numpy as np
from jax.experimental import pallas as pl
from jax.experimental.pallas import tpu as pltpu

LANE = 128          # pad channel dims to a multiple of the 128-wide lane axis
NEG_SLOPE = 0.2
BN_EPS = 1e-5


def _round_up(x, m):
    return (x + m - 1) // m * m


def _pick_block_l(L):
    for cand in (512, 256, 128, 64, 32, 16, 8):
        if L % cand == 0:
            return cand
    return L


# --------------------------- pass 1: conv1 + in_conv + BN1 partial stats ---------------------------
def _pass1_kernel(xp_ref, w1_ref, b1_ref, wi_ref, bi_ref,
                  y1_ref, res_ref, st_ref,
                  *, K, dil1, pad1, padi, halo, block_l):
    # grid = (N, L//block_l). xp_ref holds one full (halo-padded) batch row; its block index only
    # depends on n, so Pallas fetches it once per row and the inner j loop reuses it from VMEM.
    j = pl.program_id(1)
    l0 = j * block_l
    if block_l % 8 == 0:
        l0 = pl.multiple_of(l0, 8)
    win = xp_ref[0, pl.ds(l0, block_l + 2 * halo), :]         # (block_l + 2*halo, Cin_p)

    def im2col(off, dil):
        # fold the K taps into the matmul contraction dim -> one MXU pass instead of K
        return jnp.concatenate(
            [win[off + k * dil: off + k * dil + block_l, :] for k in range(K)], axis=-1)

    y1 = jnp.dot(im2col(halo - pad1, dil1), w1_ref[...],
                 preferred_element_type=jnp.float32) + b1_ref[...]       # (block_l, Cout_p) f32
    res = jnp.dot(im2col(halo - padi, 1), wi_ref[...],
                  preferred_element_type=jnp.float32) + bi_ref[...]

    y1_ref[0] = y1
    res_ref[0] = res
    # single-pass BN stats fused into the conv epilogue (per-tile partial sums, f32)
    st_ref[0, 0] = jnp.concatenate(
        [jnp.sum(y1, axis=0, keepdims=True),
         jnp.sum(y1 * y1, axis=0, keepdims=True)], axis=0)


# ------------------- pass 2: BN1 (folded) + LeakyReLU + conv2 + BN2 partial stats -------------------
def _pass2_kernel(y1p_ref, sc1_ref, sh1_ref, w2_ref, b2_ref,
                  y2_ref, st_ref,
                  *, K, dil2, pad2, L, block_l, compute_dtype):
    j = pl.program_id(1)
    l0 = j * block_l
    if block_l % 8 == 0:
        l0 = pl.multiple_of(l0, 8)
    W = block_l + 2 * pad2
    win = y1p_ref[0, pl.ds(l0, W), :]                          # f32 (W, Cout_p)
    h = win * sc1_ref[...] + sh1_ref[...]                      # BN1 folded to affine (global stats)
    h = jnp.where(h > 0, h, NEG_SLOPE * h)                     # LeakyReLU(0.2)
    # PyTorch zero-pads conv2's *input* (i.e. AFTER bn+lrelu) -> zero the halo rows explicitly
    pos = l0 + jax.lax.broadcasted_iota(jnp.int32, (W, 1), 0)
    h = jnp.where((pos >= pad2) & (pos < pad2 + L), h, 0.0).astype(compute_dtype)

    lhs = jnp.concatenate([h[k * dil2: k * dil2 + block_l, :] for k in range(K)], axis=-1)
    y2 = jnp.dot(lhs, w2_ref[...], preferred_element_type=jnp.float32) + b2_ref[...]

    y2_ref[0] = y2
    st_ref[0, 0] = jnp.concatenate(
        [jnp.sum(y2, axis=0, keepdims=True),
         jnp.sum(y2 * y2, axis=0, keepdims=True)], axis=0)


# -------------------------- pass 3: BN2 (folded) + LeakyReLU + residual add --------------------------
def _pass3_kernel(y2_ref, res_ref, sc2_ref, sh2_ref, o_ref):
    h = y2_ref[...] * sc2_ref[...] + sh2_ref[...]
    o_ref[...] = jnp.where(h > 0, h, NEG_SLOPE * h) + res_ref[...]


# --------------------------------------------- wrapper ---------------------------------------------
def conv_block_forward(x_ncl, params, *, block_l=None, compute_dtype=jnp.bfloat16):
    """ConvBlock forward. x_ncl: (N, Cin, L) float32 (PyTorch Conv1d layout)."""
    N, Cin, L = x_ncl.shape
    Cout, _, K = params["w1"].shape
    # Even K breaks the residual add in the original PyTorch module too (in_conv emits L+1 samples).
    assert K % 2 == 1, "ConvBlock requires an odd kernel_size"

    dil1, dil2 = 2, 4
    pad1 = dil1 * (K - 1) // 2
    pad2 = dil2 * (K - 1) // 2
    padi = K // 2
    halo1 = max(pad1, padi)

    if block_l is None:
        block_l = _pick_block_l(L)
    assert L % block_l == 0, "L must be divisible by block_l"
    nj = L // block_l

    cin_p = _round_up(Cin, LANE)
    cout_p = _round_up(Cout, LANE)
    cdt = compute_dtype
    f32 = jnp.float32
    itemsize = jnp.dtype(cdt).itemsize

    # ---- relayout / pad once in HBM with cheap XLA ops (no in-kernel memsets) ----
    x_nlc = jnp.transpose(x_ncl, (0, 2, 1)).astype(f32)
    xp = jnp.pad(x_nlc, ((0, 0), (halo1, halo1), (0, cin_p - Cin))).astype(cdt)

    def w_mat(w, cin_pad):      # (Cout, Cin, K) -> im2col weights (K*cin_pad, cout_p), row = k*cin_pad + c
        kk = w.shape[-1]
        m = jnp.zeros((kk, cin_pad, cout_p), f32)
        m = m.at[:, :w.shape[1], :w.shape[0]].set(jnp.transpose(w, (2, 1, 0)))
        return m.reshape(kk * cin_pad, cout_p).astype(cdt)

    def bias_row(b):
        return jnp.pad(b.astype(f32), (0, cout_p - Cout)).reshape(1, cout_p)

    def pad_c(v):
        return jnp.pad(v.astype(f32), (0, cout_p - Cout))

    w1m, wim, w2m = w_mat(params["w1"], cin_p), w_mat(params["w_in"], cin_p), w_mat(params["w2"], cout_p)
    b1r, bir, b2r = bias_row(params["b1"]), bias_row(params["b_in"]), bias_row(params["b2"])
    g1p, be1p = pad_c(params["g1"]), pad_c(params["be1"])
    g2p, be2p = pad_c(params["g2"]), pad_c(params["be2"])

    cparams = pltpu.CompilerParams(
        dimension_semantics=("parallel", "parallel"),      # shards across v7x's 2 TensorCores
        vmem_limit_bytes=48 * 1024 * 1024,                 # explicit; within v7x's 64 MiB physical VMEM
    )
    st_shape = jax.ShapeDtypeStruct((N, nj, 2, cout_p), f32)

    def bn_affine(st, gamma, beta):
        # tiny cross-tile reduction of the fused sum / sumsq accumulators -> GLOBAL (N,L) stats
        cnt = float(N * L)
        s = jnp.sum(st[:, :, 0, :], axis=(0, 1))
        ss = jnp.sum(st[:, :, 1, :], axis=(0, 1))
        mean = s / cnt
        var = jnp.maximum(ss / cnt - mean * mean, 0.0)     # biased variance (BN training mode)
        scale = gamma * jax.lax.rsqrt(var + BN_EPS)
        shift = beta - mean * scale
        return scale.reshape(1, cout_p), shift.reshape(1, cout_p)

    # -------------------------------------- pass 1 --------------------------------------
    lp1 = L + 2 * halo1
    cost1 = pl.CostEstimate(
        flops=2 * 2 * N * L * (K * cin_p) * cout_p,
        transcendentals=0,
        bytes_accessed=(xp.size * itemsize + (w1m.size + wim.size) * itemsize
                        + 2 * N * L * cout_p * 4 + N * nj * 2 * cout_p * 4))
    y1, res, st1 = pl.pallas_call(
        functools.partial(_pass1_kernel, K=K, dil1=dil1, pad1=pad1, padi=padi,
                          halo=halo1, block_l=block_l),
        grid=(N, nj),
        in_specs=[
            pl.BlockSpec((1, lp1, cin_p), lambda n, j: (n, 0, 0)),
            pl.BlockSpec((K * cin_p, cout_p), lambda n, j: (0, 0)),
            pl.BlockSpec((1, cout_p), lambda n, j: (0, 0)),
            pl.BlockSpec((K * cin_p, cout_p), lambda n, j: (0, 0)),
            pl.BlockSpec((1, cout_p), lambda n, j: (0, 0)),
        ],
        out_specs=[
            pl.BlockSpec((1, block_l, cout_p), lambda n, j: (n, j, 0)),
            pl.BlockSpec((1, block_l, cout_p), lambda n, j: (n, j, 0)),
            pl.BlockSpec((1, 1, 2, cout_p), lambda n, j: (n, j, 0, 0)),
        ],
        out_shape=[jax.ShapeDtypeStruct((N, L, cout_p), f32),
                   jax.ShapeDtypeStruct((N, L, cout_p), f32),
                   st_shape],
        compiler_params=cparams,
        cost_estimate=cost1,
    )(xp, w1m, b1r, wim, bir)

    sc1, sh1 = bn_affine(st1, g1p, be1p)

    # -------------------------------------- pass 2 --------------------------------------
    y1p = jnp.pad(y1, ((0, 0), (pad2, pad2), (0, 0)))
    lp2 = L + 2 * pad2
    cost2 = pl.CostEstimate(
        flops=2 * N * L * (K * cout_p) * cout_p,
        transcendentals=0,
        bytes_accessed=(y1p.size * 4 + w2m.size * itemsize
                        + N * L * cout_p * 4 + N * nj * 2 * cout_p * 4))
    y2, st2 = pl.pallas_call(
        functools.partial(_pass2_kernel, K=K, dil2=dil2, pad2=pad2, L=L,
                          block_l=block_l, compute_dtype=cdt),
        grid=(N, nj),
        in_specs=[
            pl.BlockSpec((1, lp2, cout_p), lambda n, j: (n, 0, 0)),
            pl.BlockSpec((1, cout_p), lambda n, j: (0, 0)),
            pl.BlockSpec((1, cout_p), lambda n, j: (0, 0)),
            pl.BlockSpec((K * cout_p, cout_p), lambda n, j: (0, 0)),
            pl.BlockSpec((1, cout_p), lambda n, j: (0, 0)),
        ],
        out_specs=[
            pl.BlockSpec((1, block_l, cout_p), lambda n, j: (n, j, 0)),
            pl.BlockSpec((1, 1, 2, cout_p), lambda n, j: (n, j, 0, 0)),
        ],
        out_shape=[jax.ShapeDtypeStruct((N, L, cout_p), f32), st_shape],
        compiler_params=cparams,
        cost_estimate=cost2,
    )(y1p, sc1, sh1, w2m, b2r)

    sc2, sh2 = bn_affine(st2, g2p, be2p)

    # -------------------------------------- pass 3 --------------------------------------
    cost3 = pl.CostEstimate(flops=4 * N * L * cout_p, transcendentals=0,
                            bytes_accessed=3 * N * L * cout_p * 4)
    out = pl.pallas_call(
        _pass3_kernel,
        grid=(N, nj),
        in_specs=[
            pl.BlockSpec((1, block_l, cout_p), lambda n, j: (n, j, 0)),
            pl.BlockSpec((1, block_l, cout_p), lambda n, j: (n, j, 0)),
            pl.BlockSpec((1, cout_p), lambda n, j: (0, 0)),
            pl.BlockSpec((1, cout_p), lambda n, j: (0, 0)),
        ],
        out_specs=pl.BlockSpec((1, block_l, cout_p), lambda n, j: (n, j, 0)),
        out_shape=jax.ShapeDtypeStruct((N, L, cout_p), f32),
        compiler_params=cparams,
        cost_estimate=cost3,
    )(y2, res, sc2, sh2)

    return jnp.transpose(out[:, :, :Cout], (0, 2, 1))


# -------------------- pure-JAX reference (for verification) --------------------
def reference_forward(x_ncl, p):
    def conv1d(x, w, b, dil, pad):
        y = jax.lax.conv_general_dilated(
            x, w, window_strides=(1,), padding=[(pad, pad)],
            rhs_dilation=(dil,), dimension_numbers=("NCH", "OIH", "NCH"))
        return y + b[None, :, None]

    def bn(h, g, be, eps=BN_EPS):
        mean = h.mean(axis=(0, 2), keepdims=True)
        var = ((h - mean) ** 2).mean(axis=(0, 2), keepdims=True)
        return (h - mean) / jnp.sqrt(var + eps) * g[None, :, None] + be[None, :, None]

    def lrelu(h):
        return jnp.where(h > 0, h, NEG_SLOPE * h)

    K = p["w1"].shape[-1]
    h = lrelu(bn(conv1d(x_ncl, p["w1"], p["b1"], 2, 2 * (K - 1) // 2), p["g1"], p["be1"]))
    h = lrelu(bn(conv1d(h, p["w2"], p["b2"], 4, 4 * (K - 1) // 2), p["g2"], p["be2"]))
    r = conv1d(x_ncl, p["w_in"], p["b_in"], 1, K // 2)
    return h + r


if __name__ == "__main__":
    N, Cin, Cout, L, K = 2, 4, 8, 16, 3

    key = jax.random.PRNGKey(0)
    ks = jax.random.split(key, 11)
    params = {
        "w1":   0.1 * jax.random.normal(ks[0], (Cout, Cin, K), jnp.float32),
        "b1":   0.1 * jax.random.normal(ks[1], (Cout,), jnp.float32),
        "g1":   1.0 + 0.1 * jax.random.normal(ks[2], (Cout,), jnp.float32),
        "be1":  0.1 * jax.random.normal(ks[3], (Cout,), jnp.float32),
        "w2":   0.1 * jax.random.normal(ks[4], (Cout, Cout, K), jnp.float32),
        "b2":   0.1 * jax.random.normal(ks[5], (Cout,), jnp.float32),
        "g2":   1.0 + 0.1 * jax.random.normal(ks[6], (Cout,), jnp.float32),
        "be2":  0.1 * jax.random.normal(ks[7], (Cout,), jnp.float32),
        "w_in": 0.1 * jax.random.normal(ks[8], (Cout, Cin, K), jnp.float32),
        "b_in": 0.1 * jax.random.normal(ks[9], (Cout,), jnp.float32),
    }
    x = jax.random.normal(ks[10], (N, Cin, L), jnp.float32)

    ref = jax.block_until_ready(reference_forward(x, params))

    # f32 matmul path (v5e recommendation / tight numerical check); block_l=8 -> grid (2, 2)
    out_f32 = jax.block_until_ready(
        conv_block_forward(x, params, block_l=8, compute_dtype=jnp.float32))
    assert out_f32.shape == (N, Cout, L), out_f32.shape
    np.testing.assert_allclose(np.asarray(out_f32), np.asarray(ref), rtol=2e-3, atol=2e-3)

    # bf16 matmul path with f32 accumulation (v6e/v7x recommendation); looser tolerance
    out_bf16 = jax.block_until_ready(
        conv_block_forward(x, params, block_l=8, compute_dtype=jnp.bfloat16))
    np.testing.assert_allclose(np.asarray(out_bf16), np.asarray(ref), rtol=6e-2, atol=6e-2)

    print("KERNEL_OK")
</pallas_src>

<mosaic_0001>
module attributes {stable_mosaic.version = 11 : i64} {
  func.func @_pass1_kernel(%arg0: i32, %arg1: i32, %arg2: memref<1x20x128xf32, #tpu.memory_space<vmem>>, %arg3: memref<384x128xf32, #tpu.memory_space<vmem>>, %arg4: memref<1x128xf32, #tpu.memory_space<vmem>>, %arg5: memref<384x128xf32, #tpu.memory_space<vmem>>, %arg6: memref<1x128xf32, #tpu.memory_space<vmem>>, %arg7: memref<1x8x128xf32, #tpu.memory_space<vmem>>, %arg8: memref<1x8x128xf32, #tpu.memory_space<vmem>>, %arg9: memref<1x1x2x128xf32, #tpu.memory_space<vmem>>) attributes {dimension_semantics = [#tpu.dimension_semantics<parallel>, #tpu.dimension_semantics<parallel>], iteration_bounds = array<i64: 2, 2>, scalar_prefetch = 0 : i64, scratch_operands = 0 : i64, tpu.core_type = #tpu.core_type<tc>, window_params = [{transform_indices = @transform_0, window_bounds = array<i64: 1, 20, 128>}, {pipeline_mode = #tpu.pipeline_mode<synchronous>, transform_indices = @transform_1, window_bounds = array<i64: 384, 128>}, {pipeline_mode = #tpu.pipeline_mode<synchronous>, transform_indices = @transform_2, window_bounds = array<i64: 1, 128>}, {pipeline_mode = #tpu.pipeline_mode<synchronous>, transform_indices = @transform_3, window_bounds = array<i64: 384, 128>}, {pipeline_mode = #tpu.pipeline_mode<synchronous>, transform_indices = @transform_4, window_bounds = array<i64: 1, 128>}, {transform_indices = @transform_5, window_bounds = array<i64: 1, 8, 128>}, {transform_indices = @transform_6, window_bounds = array<i64: 1, 8, 128>}, {transform_indices = @transform_7, window_bounds = array<i64: 1, 1, 2, 128>}]} {
    %c8_i32 = arith.constant 8 : i32
    %0 = arith.muli %arg1, %c8_i32 : i32
    %1 = tpu.assume_multiple %0, 8 : i32
    %c0 = arith.constant 0 : index
    %2 = arith.index_cast %1 : i32 to index
    %c0_0 = arith.constant 0 : index
    %3 = vector.load %arg2[%c0, %2, %c0_0] : memref<1x20x128xf32, #tpu.memory_space<vmem>>, vector<1x12x128xf32>
    %4 = vector.shape_cast %3 : vector<1x12x128xf32> to vector<12x128xf32>
    %5 = vector.extract_strided_slice %4 {offsets = [0, 0], sizes = [8, 128], strides = [1, 1]} : vector<12x128xf32> to vector<8x128xf32>
    %6 = vector.extract_strided_slice %4 {offsets = [2, 0], sizes = [8, 128], strides = [1, 1]} : vector<12x128xf32> to vector<8x128xf32>
    %7 = vector.extract_strided_slice %4 {offsets = [4, 0], sizes = [8, 128], strides = [1, 1]} : vector<12x128xf32> to vector<8x128xf32>
    %8 = tpu.concatenate %5, %6, %7 in 1 : vector<8x128xf32>, vector<8x128xf32>, vector<8x128xf32> -> vector<8x384xf32>
    %c0_1 = arith.constant 0 : index
    %c0_2 = arith.constant 0 : index
    %9 = vector.load %arg3[%c0_1, %c0_2] : memref<384x128xf32, #tpu.memory_space<vmem>>, vector<384x128xf32>
    %cst = arith.constant dense<0.000000e+00> : vector<8x128xf32>
    %10 = tpu.matmul %8, %9, %cst {dimension_numbers = #tpu.dot_dimension_numbers<[1], [0], [0], [1], [0, 0, 1, 1], [], []>} : vector<8x384xf32>, vector<384x128xf32>, vector<8x128xf32> -> vector<8x128xf32>
    %c0_3 = arith.constant 0 : index
    %c0_4 = arith.constant 0 : index
    %11 = vector.load %arg4[%c0_3, %c0_4] : memref<1x128xf32, #tpu.memory_space<vmem>>, vector<1x128xf32>
    %12 = vector.broadcast %11 : vector<1x128xf32> to vector<8x128xf32>
    %13 = arith.addf %10, %12 : vector<8x128xf32>
    %14 = vector.extract_strided_slice %4 {offsets = [1, 0], sizes = [8, 128], strides = [1, 1]} : vector<12x128xf32> to vector<8x128xf32>
    %15 = vector.extract_strided_slice %4 {offsets = [2, 0], sizes = [8, 128], strides = [1, 1]} : vector<12x128xf32> to vector<8x128xf32>
    %16 = vector.extract_strided_slice %4 {offsets = [3, 0], sizes = [8, 128], strides = [1, 1]} : vector<12x128xf32> to vector<8x128xf32>
    %17 = tpu.concatenate %14, %15, %16 in 1 : vector<8x128xf32>, vector<8x128xf32>, vector<8x128xf32> -> vector<8x384xf32>
    %c0_5 = arith.constant 0 : index
    %c0_6 = arith.constant 0 : index
    %18 = vector.load %arg5[%c0_5, %c0_6] : memref<384x128xf32, #tpu.memory_space<vmem>>, vector<384x128xf32>
    %cst_7 = arith.constant dense<0.000000e+00> : vector<8x128xf32>
    %19 = tpu.matmul %17, %18, %cst_7 {dimension_numbers = #tpu.dot_dimension_numbers<[1], [0], [0], [1], [0, 0, 1, 1], [], []>} : vector<8x384xf32>, vector<384x128xf32>, vector<8x128xf32> -> vector<8x128xf32>
    %c0_8 = arith.constant 0 : index
    %c0_9 = arith.constant 0 : index
    %20 = vector.load %arg6[%c0_8, %c0_9] : memref<1x128xf32, #tpu.memory_space<vmem>>, vector<1x128xf32>
    %21 = vector.broadcast %20 : vector<1x128xf32> to vector<8x128xf32>
    %22 = arith.addf %19, %21 : vector<8x128xf32>
    %c0_10 = arith.constant 0 : index
    %c0_11 = arith.constant 0 : index
    %c0_12 = arith.constant 0 : index
    %23 = vector.load %arg7[%c0_10, %c0_11, %c0_12] : memref<1x8x128xf32, #tpu.memory_space<vmem>>, vector<1x8x128xf32>
    %24 = vector.shape_cast %23 : vector<1x8x128xf32> to vector<8x128xf32>
    %25 = vector.shape_cast %13 : vector<8x128xf32> to vector<1x8x128xf32>
    tpu.vector_store %arg7[%c0_10, %c0_11, %c0_12], %25 {strides = array<i32>} : memref<1x8x128xf32, #tpu.memory_space<vmem>>, vector<1x8x128xf32>,
    %c0_13 = arith.constant 0 : index
    %c0_14 = arith.constant 0 : index
    %c0_15 = arith.constant 0 : index
    %26 = vector.load %arg8[%c0_13, %c0_14, %c0_15] : memref<1x8x128xf32, #tpu.memory_space<vmem>>, vector<1x8x128xf32>
    %27 = vector.shape_cast %26 : vector<1x8x128xf32> to vector<8x128xf32>
    %28 = vector.shape_cast %22 : vector<8x128xf32> to vector<1x8x128xf32>
    tpu.vector_store %arg8[%c0_13, %c0_14, %c0_15], %28 {strides = array<i32>} : memref<1x8x128xf32, #tpu.memory_space<vmem>>, vector<1x8x128xf32>,
    %cst_16 = arith.constant dense<0.000000e+00> : vector<128xf32>
    %29 = vector.multi_reduction <add>, %13, %cst_16 [0] : vector<8x128xf32> to vector<128xf32>
    %30 = vector.shape_cast %29 : vector<128xf32> to vector<1x128xf32>
    %31 = arith.mulf %13, %13 : vector<8x128xf32>
    %cst_17 = arith.constant dense<0.000000e+00> : vector<128xf32>
    %32 = vector.multi_reduction <add>, %31, %cst_17 [0] : vector<8x128xf32> to vector<128xf32>
    %33 = vector.shape_cast %32 : vector<128xf32> to vector<1x128xf32>
    %34 = tpu.concatenate %30, %33 in 0 : vector<1x128xf32>, vector<1x128xf32> -> vector<2x128xf32>
    %c0_18 = arith.constant 0 : index
    %c0_19 = arith.constant 0 : index
    %c0_20 = arith.constant 0 : index
    %c0_21 = arith.constant 0 : index
    %35 = vector.load %arg9[%c0_18, %c0_19, %c0_20, %c0_21] : memref<1x1x2x128xf32, #tpu.memory_space<vmem>>, vector<1x1x2x128xf32>
    %36 = vector.shape_cast %35 : vector<1x1x2x128xf32> to vector<2x128xf32>
    %37 = vector.shape_cast %34 : vector<2x128xf32> to vector<1x1x2x128xf32>
    tpu.vector_store %arg9[%c0_18, %c0_19, %c0_20, %c0_21], %37 {strides = array<i32>} : memref<1x1x2x128xf32, #tpu.memory_space<vmem>>, vector<1x1x2x128xf32>,
    return
  }
  func.func @transform_0(%arg0: i32, %arg1: i32) -> (i32, i32, i32) {
    %c0_i32 = arith.constant 0 : i32
    %c0_i32_0 = arith.constant 0 : i32
    %c0_i32_1 = arith.constant 0 : i32
    return %arg0, %c0_i32, %c0_i32_0 : i32, i32, i32
  }
  func.func @transform_1(%arg0: i32, %arg1: i32) -> (i32, i32) {
    %c0_i32 = arith.constant 0 : i32
    %c0_i32_0 = arith.constant 0 : i32
    %c0_i32_1 = arith.constant 0 : i32
    return %c0_i32, %c0_i32_0 : i32, i32
  }
  func.func @transform_2(%arg0: i32, %arg1: i32) -> (i32, i32) {
    %c0_i32 = arith.constant 0 : i32
    %c0_i32_0 = arith.constant 0 : i32
    %c0_i32_1 = arith.constant 0 : i32
    return %c0_i32, %c0_i32_0 : i32, i32
  }
  func.func @transform_3(%arg0: i32, %arg1: i32) -> (i32, i32) {
    %c0_i32 = arith.constant 0 : i32
    %c0_i32_0 = arith.constant 0 : i32
    %c0_i32_1 = arith.constant 0 : i32
    return %c0_i32, %c0_i32_0 : i32, i32
  }
  func.func @transform_4(%arg0: i32, %arg1: i32) -> (i32, i32) {
    %c0_i32 = arith.constant 0 : i32
    %c0_i32_0 = arith.constant 0 : i32
    %c0_i32_1 = arith.constant 0 : i32
    return %c0_i32, %c0_i32_0 : i32, i32
  }
  func.func @transform_5(%arg0: i32, %arg1: i32) -> (i32, i32, i32) {
    %c0_i32 = arith.constant 0 : i32
    %c0_i32_0 = arith.constant 0 : i32
    return %arg0, %arg1, %c0_i32 : i32, i32, i32
  }
  func.func @transform_6(%arg0: i32, %arg1: i32) -> (i32, i32, i32) {
    %c0_i32 = arith.constant 0 : i32
    %c0_i32_0 = arith.constant 0 : i32
    return %arg0, %arg1, %c0_i32 : i32, i32, i32
  }
  func.func @transform_7(%arg0: i32, %arg1: i32) -> (i32, i32, i32, i32) {
    %c0_i32 = arith.constant 0 : i32
    %c0_i32_0 = arith.constant 0 : i32
    %c0_i32_1 = arith.constant 0 : i32
    return %arg0, %arg1, %c0_i32, %c0_i32_0 : i32, i32, i32, i32
  }
}

</mosaic_0001>

<llo_original>
// kernel: tpu_custom_call.1
$region0: #{tpu_custom_call.1}
  #allocation0 [shape = 'u32[]', space=smem, size = 0x4, offset = 0x4, fixed_abs, tag = 'smem constant byte address 0x4 - core index']
  #allocation1 [shape = 'u32[72,128]{1,0:T(1,128)}', space=vmem, size = 0x9000, scoped, tag = 'internal scratch']
  %s0 = inlined_call_operand.vmem [shape: f32[2,20,128], index: 0, kind: input, shape index: {}]
  %s1 = inlined_call_operand.hbm [shape: f32[384,128], index: 1, kind: input, shape index: {}]
  %s2 = inlined_call_operand.vmem [shape: f32[1,128], index: 2, kind: input, shape index: {}]
  %s3 = inlined_call_operand.hbm [shape: f32[384,128], index: 3, kind: input, shape index: {}]
  %s4 = inlined_call_operand.vmem [shape: f32[1,128], index: 4, kind: input, shape index: {}]
  %s5 = inlined_call_operand.hbm [shape: f32[2,16,128], index: 5, kind: output, shape index: {0}]
  %s6 = inlined_call_operand.hbm [shape: f32[2,16,128], index: 6, kind: output, shape index: {1}]
  %s7 = inlined_call_operand.hbm [shape: f32[2,2,2,128], index: 7, kind: output, shape index: {2}]
  %8 = xla_tuple %s5, %s6, %s7
  %s9 = sld [smem:[#allocation0]]
  $region77: #{tpu_custom_call.1} parent=0
    _
  %s11 = ssub.s32 1, %s9
  %s12 = scalar_select 0, %s11, %s9
  $region1: #{tpu_custom_call.1} parent=0
    #allocation2 [shape = 'u8[196608]{0}', space=vmem, size = 0x30000, scoped, tag = 'input window, operand 1, single buffered']
    #allocation3 [shape = 's32[2]{0}', space=sflag, size = 0x8, scoped, tag = 'scoped memory for tpu_custom_call.1']
    #allocation4 [shape = 's32[2]{0}', space=sflag, size = 0x8, scoped, tag = 'scoped memory for tpu_custom_call.1']
    #allocation5 [shape = 'u8[196608]{0}', space=vmem, size = 0x30000, scoped, tag = 'input window, operand 3, single buffered']
    #allocation6 [shape = 's32[1]{0}', space=sflag, size = 0x4, scoped, tag = 'scoped memory for tpu_custom_call.1']
    #allocation7 [shape = 'u8[8192]{0}', space=vmem, size = 0x2000, scoped, tag = 'output window, operand 0']
    #allocation8 [shape = 'u8[8192]{0}', space=vmem, size = 0x2000, scoped, tag = 'output window, operand 1']
    #allocation9 [shape = 's32[2]{0}', space=sflag, size = 0x8, scoped, tag = 'scoped memory for tpu_custom_call.1']
    #allocation10 [shape = 'u8[2048]{0}', space=vmem, size = 0x800, scoped, tag = 'output window, operand 2']
    %13 = vsyncpa [#allocation3], 0
    %14 = vsyncpa [#allocation6], 0
    %15 = vsyncpa [#allocation4], 0
    %s16 = scalar_lea.sflag [#allocation4], 1
    %17 = vsyncpa %s16, 0
    %18 = vsyncpa [#allocation9], 0
    %s19 = scalar_lea.sflag [#allocation9], 1
    %20 = vsyncpa %s19, 0
    loop: start=0, step=1, limit=6
    $region2: #{tpu_custom_call.1} parent=1 // loop_pre_header
      _
    $region3: #{tpu_custom_call.1} parent=1 // loop_header
      %s22 = sphi 0, %s26
      %p23 = scmp.ge.s32.totalorder %s22, 6
      %s29 = sphi 0, %s41
      %s30 = sphi 0, %s37
      %s31 = sphi 0, %s29
      %s32 = sphi 0, %s30
      %s33 = sphi 0, %s31
      %s34 = sphi 0, %s32
      %s44 = sphi 0, %s46
      %s47 = sphi 0, %s44
      %s48 = sphi 0, %s47
      %s64 = sphi 0, %s48
      %s68 = sphi 0, %s68
      %s70 = sphi 0, %s68
      %s71 = sphi 0, %s70
      %s85 = sphi 0, %s71
      %s89 = sphi 0, %s89
      %s91 = sphi 0, %s89
      %s92 = sphi 0, %s91
      %s106 = sphi 0, %s92
      %s110 = sphi 0, %s110
      %s112 = sphi 0, %s110
      %s113 = sphi 0, %s112
      %s127 = sphi 0, %s113
      %s131 = sphi 0, %s131
      %s133 = sphi 0, %s131
      %s134 = sphi 0, %s133
      %s148 = sphi 0, %s134
      %s156 = sphi 0, %s158
      %s159 = sphi 0, %s156
      %s160 = sphi 0, %s159
      %s176 = sphi 0, %s160
      %s184 = sphi 0, %s186
      %s187 = sphi 0, %s184
      %s188 = sphi 0, %s187
      %s204 = sphi 0, %s188
      %s212 = sphi 0, %s214
      %s215 = sphi 0, %s212
      %s216 = sphi 0, %s215
      %s232 = sphi 0, %s216
    $region4: #{tpu_custom_call.1} parent=1 // loop_header_branch
      %25 = sbr.rel (%p23) target = $region8
    $region5: #{tpu_custom_call.1} parent=1 // loop_body
      %s27 = ssub.s32 %s22, 1
      %s28 = ssub.s32 %s22, 2
      %s35 = sadd.s32 1, %s30
      %p36 = scmp.ge.s32.totalorder %s35, 2
      %s37 = scalar_select %p36, 0, %s35
      %s38 = sadd.s32 1, %s29
      %s39 = scalar_select %p36, %s38, %s29
      %p40 = scmp.ge.s32.totalorder %s39, 2
      %s41 = scalar_select %p40, 0, %s39
      %s42 = ssub.s32 %s29, %s41
      %p43 = scmp.eq.s32.totalorder %s42, 0
      %s45 = sadd.s32 %s44, 1
      %s46 = scalar_select %p43, %s44, %s45
      %p49 = pneg %p43
      %p50 = scmp.eq.s32.totalorder %s22, 3
      %p51 = por %p49, %p50
      %p52 = scmp.ne.s32.totalorder %s44, %s47
      %p53 = scmp.eq.s32.totalorder %s22, 0
      %p54 = por %p52, %p53
      %p55 = scmp.ne.s32.totalorder %s44, %s47
      %p56 = scmp.eq.s32.totalorder %s27, 3
      %p57 = por %p55, %p56
      %p58 = scmp.ne.s32.totalorder %s47, %s48
      %p59 = scmp.eq.s32.totalorder %s27, 0
      %p60 = por %p58, %p59
      %p61 = scmp.ne.s32.totalorder %s47, %s48
      %p62 = scmp.eq.s32.totalorder %s28, 3
      %p63 = por %p61, %p62
      %p65 = scmp.ne.s32.totalorder %s48, %s64
      %p66 = scmp.eq.s32.totalorder %s28, 0
      %p67 = por %p65, %p66
      %s69 = sadd.s32 %s68, 1
      %p72 = scmp.eq.s32.totalorder %s22, 3
      %p73 = scmp.ne.s32.totalorder %s68, %s70
      %p74 = scmp.eq.s32.totalorder %s22, 0
      %p75 = por %p73, %p74
      %p76 = scmp.ne.s32.totalorder %s68, %s70
      %p77 = scmp.eq.s32.totalorder %s27, 3
      %p78 = por %p76, %p77
      %p79 = scmp.ne.s32.totalorder %s70, %s71
      %p80 = scmp.eq.s32.totalorder %s27, 0
      %p81 = por %p79, %p80
      %p82 = scmp.ne.s32.totalorder %s70, %s71
      %p83 = scmp.eq.s32.totalorder %s28, 3
      %p84 = por %p82, %p83
      %p86 = scmp.ne.s32.totalorder %s71, %s85
      %p87 = scmp.eq.s32.totalorder %s28, 0
      %p88 = por %p86, %p87
      %s90 = sadd.s32 %s89, 1
      %p93 = scmp.eq.s32.totalorder %s22, 3
      %p94 = scmp.ne.s32.totalorder %s89, %s91
      %p95 = scmp.eq.s32.totalorder %s22, 0
      %p96 = por %p94, %p95
      %p97 = scmp.ne.s32.totalorder %s89, %s91
      %p98 = scmp.eq.s32.totalorder %s27, 3
      %p99 = por %p97, %p98
      %p100 = scmp.ne.s32.totalorder %s91, %s92
      %p101 = scmp.eq.s32.totalorder %s27, 0
      %p102 = por %p100, %p101
      %p103 = scmp.ne.s32.totalorder %s91, %s92
      %p104 = scmp.eq.s32.totalorder %s28, 3
      %p105 = por %p103, %p104
      %p107 = scmp.ne.s32.totalorder %s92, %s106
      %p108 = scmp.eq.s32.totalorder %s28, 0
      %p109 = por %p107, %p108
      %s111 = sadd.s32 %s110, 1
      %p114 = scmp.eq.s32.totalorder %s22, 3
      %p115 = scmp.ne.s32.totalorder %s110, %s112
      %p116 = scmp.eq.s32.totalorder %s22, 0
      %p117 = por %p115, %p116
      %p118 = scmp.ne.s32.totalorder %s110, %s112
      %p119 = scmp.eq.s32.totalorder %s27, 3
      %p120 = por %p118, %p119
      %p121 = scmp.ne.s32.totalorder %s112, %s113
      %p122 = scmp.eq.s32.totalorder %s27, 0
      %p123 = por %p121, %p122
      %p124 = scmp.ne.s32.totalorder %s112, %s113
      %p125 = scmp.eq.s32.totalorder %s28, 3
      %p126 = por %p124, %p125
      %p128 = scmp.ne.s32.totalorder %s113, %s127
      %p129 = scmp.eq.s32.totalorder %s28, 0
      %p130 = por %p128, %p129
      %s132 = sadd.s32 %s131, 1
      %p135 = scmp.eq.s32.totalorder %s22, 3
      %p136 = scmp.ne.s32.totalorder %s131, %s133
      %p137 = scmp.eq.s32.totalorder %s22, 0
      %p138 = por %p136, %p137
      %p139 = scmp.ne.s32.totalorder %s131, %s133
      %p140 = scmp.eq.s32.totalorder %s27, 3
      %p141 = por %p139, %p140
      %p142 = scmp.ne.s32.totalorder %s133, %s134
      %p143 = scmp.eq.s32.totalorder %s27, 0
      %p144 = por %p142, %p143
      %p145 = scmp.ne.s32.totalorder %s133, %s134
      %p146 = scmp.eq.s32.totalorder %s28, 3
      %p147 = por %p145, %p146
      %p149 = scmp.ne.s32.totalorder %s134, %s148
      %p150 = scmp.eq.s32.totalorder %s28, 0
      %p151 = por %p149, %p150
      %s152 = ssub.s32 %s29, %s41
      %s153 = ssub.s32 %s30, %s37
      %s154 = sor.u32 %s152, %s153
      %p155 = scmp.eq.s32.totalorder %s154, 0
      %s157 = sadd.s32 %s156, 1
      %s158 = scalar_select %p155, %s156, %s157
      %p161 = pneg %p155
      %p162 = scmp.eq.s32.totalorder %s22, 3
      %p163 = por %p161, %p162
      %p164 = scmp.ne.s32.totalorder %s156, %s159
      %p165 = scmp.eq.s32.totalorder %s22, 0
      %p166 = por %p164, %p165
      %p167 = scmp.ne.s32.totalorder %s156, %s159
      %p168 = scmp.eq.s32.totalorder %s27, 3
      %p169 = por %p167, %p168
      %p170 = scmp.ne.s32.totalorder %s159, %s160
      %p171 = scmp.eq.s32.totalorder %s27, 0
      %p172 = por %p170, %p171
      %p173 = scmp.ne.s32.totalorder %s159, %s160
      %p174 = scmp.eq.s32.totalorder %s28, 3
      %p175 = por %p173, %p174
      %p177 = scmp.ne.s32.totalorder %s160, %s176
      %p178 = scmp.eq.s32.totalorder %s28, 0
      %p179 = por %p177, %p178
      %s180 = ssub.s32 %s29, %s41
      %s181 = ssub.s32 %s30, %s37
      %s182 = sor.u32 %s180, %s181
      %p183 = scmp.eq.s32.totalorder %s182, 0
      %s185 = sadd.s32 %s184, 1
      %s186 = scalar_select %p183, %s184, %s185
      %p189 = pneg %p183
      %p190 = scmp.eq.s32.totalorder %s22, 3
      %p191 = por %p189, %p190
      %p192 = scmp.ne.s32.totalorder %s184, %s187
      %p193 = scmp.eq.s32.totalorder %s22, 0
      %p194 = por %p192, %p193
      %p195 = scmp.ne.s32.totalorder %s184, %s187
      %p196 = scmp.eq.s32.totalorder %s27, 3
      %p197 = por %p195, %p196
      %p198 = scmp.ne.s32.totalorder %s187, %s188
      %p199 = scmp.eq.s32.totalorder %s27, 0
      %p200 = por %p198, %p199
      %p201 = scmp.ne.s32.totalorder %s187, %s188
      %p202 = scmp.eq.s32.totalorder %s28, 3
      %p203 = por %p201, %p202
      %p205 = scmp.ne.s32.totalorder %s188, %s204
      %p206 = scmp.eq.s32.totalorder %s28, 0
      %p207 = por %p205, %p206
      %s208 = ssub.s32 %s29, %s41
      %s209 = ssub.s32 %s30, %s37
      %s210 = sor.u32 %s208, %s209
      %p211 = scmp.eq.s32.totalorder %s210, 0
      %s213 = sadd.s32 %s212, 1
      %s214 = scalar_select %p211, %s212, %s213
      %p217 = pneg %p211
      %p218 = scmp.eq.s32.totalorder %s22, 3
      %p219 = por %p217, %p218
      %p220 = scmp.ne.s32.totalorder %s212, %s215
      %p221 = scmp.eq.s32.totalorder %s22, 0
      %p222 = por %p220, %p221
      %p223 = scmp.ne.s32.totalorder %s212, %s215
      %p224 = scmp.eq.s32.totalorder %s27, 3
      %p225 = por %p223, %p224
      %p226 = scmp.ne.s32.totalorder %s215, %s216
      %p227 = scmp.eq.s32.totalorder %s27, 0
      %p228 = por %p226, %p227
      %p229 = scmp.ne.s32.totalorder %s215, %s216
      %p230 = scmp.eq.s32.totalorder %s28, 3
      %p231 = por %p229, %p230
      %p233 = scmp.ne.s32.totalorder %s216, %s232
      %p234 = scmp.eq.s32.totalorder %s28, 0
      %p235 = por %p233, %p234
      %p236 = scmp.le.s32.totalorder 1, %s22
      %p237 = scmp.lt.s32.totalorder %s22, 5
      %p238 = pnand %p236, %p237
      %p239 = pneg %p238
      // Predicated region
      $region9: #{tpu_custom_call.1} parent=5 // pred_check
        _
      $region10: #{tpu_custom_call.1} parent=5 // pred_check_branch
        %241 = sbr.rel (%p238) target = $region12
      $region11: #{tpu_custom_call.1} parent=5 // pred_region
        %s242 = ssub.s32 %s22, 1
        // Predicated region
        $region13: #{tpu_custom_call.1} parent=11 // pred_check
          %p243 = pneg %p81
        $region14: #{tpu_custom_call.1} parent=11 // pred_check_branch
          %245 = sbr.rel (%p243) target = $region16
        $region15: #{tpu_custom_call.1} parent=11 // pred_region
          %247 = vsyncadd [#allocation3], 0
          %s248 = sshll.u32 %s1, 4
          %s249 = int_to_ptr.hbm [resolvable:$true] %s248
          %s250 = sshll.u32 [#allocation2], 4
          %s251 = int_to_ptr.vmem [resolvable:$true] %s250
          %256 = dma.hbm_to_vmem [thread:$0]  %s249, 6144, %s251, [#allocation3], 128, 128, 8
        $region16: #{tpu_custom_call.1} parent=11 // pred_fallthru
          _
        // Predicated region
        $region17: #{tpu_custom_call.1} parent=11 // pred_check
          %p257 = pneg %p102
        $region18: #{tpu_custom_call.1} parent=11 // pred_check_branch
          %259 = sbr.rel (%p257) target = $region20
        $region19: #{tpu_custom_call.1} parent=11 // pred_region
          _
        $region20: #{tpu_custom_call.1} parent=11 // pred_fallthru
          _
        // Predicated region
        $region21: #{tpu_custom_call.1} parent=11 // pred_check
          %p260 = pneg %p123
        $region22: #{tpu_custom_call.1} parent=11 // pred_check_branch
          %262 = sbr.rel (%p260) target = $region24
        $region23: #{tpu_custom_call.1} parent=11 // pred_region
          %264 = vsyncadd [#allocation6], 0
          %s265 = sshll.u32 %s3, 4
          %s266 = int_to_ptr.hbm [resolvable:$true] %s265
          %s267 = sshll.u32 [#allocation5], 4
          %s268 = int_to_ptr.vmem [resolvable:$true] %s267
          %273 = dma.hbm_to_vmem [thread:$0]  %s266, 6144, %s268, [#allocation6], 128, 128, 8
        $region24: #{tpu_custom_call.1} parent=11 // pred_fallthru
          _
        // Predicated region
        $region25: #{tpu_custom_call.1} parent=11 // pred_check
          %p274 = pneg %p144
        $region26: #{tpu_custom_call.1} parent=11 // pred_check_branch
          %276 = sbr.rel (%p274) target = $region28
        $region27: #{tpu_custom_call.1} parent=11 // pred_region
          _
        $region28: #{tpu_custom_call.1} parent=11 // pred_fallthru
          _
      $region12: #{tpu_custom_call.1} parent=5 // pred_fallthru
        _
      %p277 = scmp.lt.s32.totalorder %s22, 4
      // Predicated region
      $region29: #{tpu_custom_call.1} parent=5 // pred_check
        %p278 = pneg %p277
      $region30: #{tpu_custom_call.1} parent=5 // pred_check_branch
        %280 = sbr.rel (%p278) target = $region32
      $region31: #{tpu_custom_call.1} parent=5 // pred_region
        // Predicated region
        $region33: #{tpu_custom_call.1} parent=31 // pred_check
          %p281 = pneg %p54
        $region34: #{tpu_custom_call.1} parent=31 // pred_check_branch
          %283 = sbr.rel (%p281) target = $region36
        $region35: #{tpu_custom_call.1} parent=31 // pred_region
          %p284 = scmp.lt.s32.totalorder %s29, 1
          %s285 = scalar_select %p284, %s29, 1
          %s286 = smul.addr %s285, 3
          %s287 = smul.addr %s286, 8
          %s288 = scalar_lea.vmem %s0, %s287
        $region36: #{tpu_custom_call.1} parent=31 // pred_fallthru
          _
      $region32: #{tpu_custom_call.1} parent=5 // pred_fallthru
        _
      %p289 = scmp.le.s32.totalorder 1, %s22
      %p290 = scmp.lt.s32.totalorder %s22, 5
      %p291 = pnand %p289, %p290
      %p292 = pneg %p291
      // Predicated region
      $region37: #{tpu_custom_call.1} parent=5 // pred_check
        _
      $region38: #{tpu_custom_call.1} parent=5 // pred_check_branch
        %294 = sbr.rel (%p291) target = $region40
      $region39: #{tpu_custom_call.1} parent=5 // pred_region
        %s295 = ssub.s32 %s22, 1
        // Predicated region
        $region41: #{tpu_custom_call.1} parent=39 // pred_check
          %p296 = pneg %p81
        $region42: #{tpu_custom_call.1} parent=39 // pred_check_branch
          %298 = sbr.rel (%p296) target = $region44
        $region43: #{tpu_custom_call.1} parent=39 // pred_region
          %300 = dma.done [#allocation3], 6144
        $region44: #{tpu_custom_call.1} parent=39 // pred_fallthru
          _
        // Predicated region
        $region45: #{tpu_custom_call.1} parent=39 // pred_check
          %p301 = pneg %p123
        $region46: #{tpu_custom_call.1} parent=39 // pred_check_branch
          %303 = sbr.rel (%p301) target = $region48
        $region47: #{tpu_custom_call.1} parent=39 // pred_region
          %305 = dma.done [#allocation6], 6144
        $region48: #{tpu_custom_call.1} parent=39 // pred_fallthru
          _
        %p306 = scmp.lt.s32.totalorder %s31, 1
        %s307 = scalar_select %p306, %s31, 1
        %s308 = smul.addr %s307, 3
        %s309 = smul.addr %s308, 8
        %s310 = scalar_lea.vmem %s0, %s309
        %p311 = pneg %p60
        %p312 = pneg %p57
        %p313 = pneg %p81
        %p314 = pneg %p78
        %p315 = pneg %p102
        %p316 = pneg %p99
        %p317 = pneg %p123
        %p318 = pneg %p120
        %p319 = pneg %p144
        %p320 = pneg %p141
        %p321 = pneg %p172
        %p322 = pneg %p169
        %s323 = sand.u32 %s159, 1
        %s324 = scalar_lea.sflag [#allocation4], %s323
        %s325 = sand.u32 %s159, 1
        %s326 = smul.addr %s325, 8
        %s327 = scalar_lea.vmem [#allocation7], %s326
        %p328 = pneg %p200
        %p329 = pneg %p197
        %s330 = sand.u32 %s27, 1
        %s331 = scalar_lea.sflag [#allocation9], %s330
        %s332 = sand.u32 %s187, 1
        %s333 = smul.addr %s332, 8
        %s334 = scalar_lea.vmem [#allocation8], %s333
        %p335 = pneg %p228
        %p336 = pneg %p225
        %s337 = sand.u32 %s27, 1
        %s338 = scalar_lea.sflag [#allocation9], %s337
        %s339 = sand.u32 %s215, 1
        %s340 = smul.addr %s339, 2
        %s341 = scalar_lea.vmem [#allocation10], %s340
        %p342 = scmp.lt.s32.totalorder %s31, 1
        %s343 = scalar_select %p342, %s31, 1
        %s344 = smul.addr %s343, 3
        %s345 = smul.addr %s344, 8
        %s346 = scalar_lea.vmem %s0, %s345
        %s347 = smul.u32 %s32, 8
        %s348 = scalar_lea.vmem %s346, %s347
        %v349 = vld [vmem:[%s348] sm:$0xff]
        %v350 = vld [vmem:[%s348 + $0x8] sm:$0xf]
        %vm353 = vcmask 1045504
        %v354 = vrot.slane %v349, 2
        %v355 = vrot.slane %v350, 2
        %v356 = vsel %vm353, %v354, %v355
        %vm358 = vcmask 1043456
        %v359 = vrot.slane %v349, 4
        %v360 = vrot.slane %v350, 4
        %v361 = vsel %vm358, %v359, %v360
        %v363 = vld [vmem:[#allocation2] sm:$0xff]
        %v364 = vld [vmem:[#allocation2 + $0x8] sm:$0xff]
        %v365 = vld [vmem:[#allocation2 + $0x10] sm:$0xff]
        %v366 = vld [vmem:[#allocation2 + $0x18] sm:$0xff]
        %v367 = vld [vmem:[#allocation2 + $0x20] sm:$0xff]
        %v368 = vld [vmem:[#allocation2 + $0x28] sm:$0xff]
        %v369 = vld [vmem:[#allocation2 + $0x30] sm:$0xff]
        %v370 = vld [vmem:[#allocation2 + $0x38] sm:$0xff]
        %v371 = vld [vmem:[#allocation2 + $0x40] sm:$0xff]
        %v372 = vld [vmem:[#allocation2 + $0x48] sm:$0xff]
        %v373 = vld [vmem:[#allocation2 + $0x50] sm:$0xff]
        %v374 = vld [vmem:[#allocation2 + $0x58] sm:$0xff]
        %v375 = vld [vmem:[#allocation2 + $0x60] sm:$0xff]
        %v376 = vld [vmem:[#allocation2 + $0x68] sm:$0xff]
        %v377 = vld [vmem:[#allocation2 + $0x70] sm:$0xff]
        %v378 = vld [vmem:[#allocation2 + $0x78] sm:$0xff]
        %v379 = vld [vmem:[#allocation2 + $0x80] sm:$0xff]
        %v380 = vld [vmem:[#allocation2 + $0x88] sm:$0xff]
        %v381 = vld [vmem:[#allocation2 + $0x90] sm:$0xff]
        %v382 = vld [vmem:[#allocation2 + $0x98] sm:$0xff]
        %v383 = vld [vmem:[#allocation2 + $0xa0] sm:$0xff]
        %v384 = vld [vmem:[#allocation2 + $0xa8] sm:$0xff]
        %v385 = vld [vmem:[#allocation2 + $0xb0] sm:$0xff]
        %v386 = vld [vmem:[#allocation2 + $0xb8] sm:$0xff]
        %v387 = vld [vmem:[#allocation2 + $0xc0] sm:$0xff]
        %v388 = vld [vmem:[#allocation2 + $0xc8] sm:$0xff]
        %v389 = vld [vmem:[#allocation2 + $0xd0] sm:$0xff]
        %v390 = vld [vmem:[#allocation2 + $0xd8] sm:$0xff]
        %v391 = vld [vmem:[#allocation2 + $0xe0] sm:$0xff]
        %v392 = vld [vmem:[#allocation2 + $0xe8] sm:$0xff]
        %v393 = vld [vmem:[#allocation2 + $0xf0] sm:$0xff]
        %v394 = vld [vmem:[#allocation2 + $0xf8] sm:$0xff]
        %v395 = vld [vmem:[#allocation2 + $0x100] sm:$0xff]
        %v396 = vld [vmem:[#allocation2 + $0x108] sm:$0xff]
        %v397 = vld [vmem:[#allocation2 + $0x110] sm:$0xff]
        %v398 = vld [vmem:[#allocation2 + $0x118] sm:$0xff]
        %v399 = vld [vmem:[#allocation2 + $0x120] sm:$0xff]
        %v400 = vld [vmem:[#allocation2 + $0x128] sm:$0xff]
        %v401 = vld [vmem:[#allocation2 + $0x130] sm:$0xff]
        %v402 = vld [vmem:[#allocation2 + $0x138] sm:$0xff]
        %v403 = vld [vmem:[#allocation2 + $0x140] sm:$0xff]
        %v404 = vld [vmem:[#allocation2 + $0x148] sm:$0xff]
        %v405 = vld [vmem:[#allocation2 + $0x150] sm:$0xff]
        %v406 = vld [vmem:[#allocation2 + $0x158] sm:$0xff]
        %v407 = vld [vmem:[#allocation2 + $0x160] sm:$0xff]
        %v408 = vld [vmem:[#allocation2 + $0x168] sm:$0xff]
        %v409 = vld [vmem:[#allocation2 + $0x170] sm:$0xff]
        %v410 = vld [vmem:[#allocation2 + $0x178] sm:$0xff]
        %v411 = vld [vmem:[%s2] sm:$0x1]
        %v413 = vperm.slane %v411, 0
        %415 = vmatpush.msra.mxu0 %v378
        %416 = vmatpush.msra.mxu0 %v377
        %417 = vmatpush.msra.mxu0 %v376
        %418 = vmatpush.msra.mxu0 %v375
        %419 = vmatpush.msra.mxu0 %v374
        %420 = vmatpush.msra.mxu0 %v373
        %421 = vmatpush.msra.mxu0 %v372
        %422 = vmatpush.msra.mxu0 %v371
        %423 = vmatpush.msra.mxu0 %v370
        %424 = vmatpush.msra.mxu0 %v369
        %425 = vmatpush.msra.mxu0 %v368
        %426 = vmatpush.msra.mxu0 %v367
        %427 = vmatpush.msra.mxu0 %v366
        %428 = vmatpush.msra.mxu0 %v365
        %429 = vmatpush.msra.mxu0 %v364
        %430 = vmatpush.msra.mxu0 %v363
        %431 = vmatmul.f32.gmra.mxu0 %v349
        %v432 = vpop.f32.mrf.mxu0
        %v433 = vadd.f32 %v413, %v432
        %434 = vdwg.mxu0
        %435 = vmatpush.msra.mxu0 %v394
        %436 = vmatpush.msra.mxu0 %v393
        %437 = vmatpush.msra.mxu0 %v392
        %438 = vmatpush.msra.mxu0 %v391
        %439 = vmatpush.msra.mxu0 %v390
        %440 = vmatpush.msra.mxu0 %v389
        %441 = vmatpush.msra.mxu0 %v388
        %442 = vmatpush.msra.mxu0 %v387
        %443 = vmatpush.msra.mxu0 %v386
        %444 = vmatpush.msra.mxu0 %v385
        %445 = vmatpush.msra.mxu0 %v384
        %446 = vmatpush.msra.mxu0 %v383
        %447 = vmatpush.msra.mxu0 %v382
        %448 = vmatpush.msra.mxu0 %v381
        %449 = vmatpush.msra.mxu0 %v380
        %450 = vmatpush.msra.mxu0 %v379
        %451 = vmatmul.f32.gmra.mxu0 %v356
        %v452 = vpop.f32.mrf.mxu0
        %v453 = vadd.f32 %v433, %v452
        %454 = vdwg.mxu0
        %455 = vmatpush.msra.mxu0 %v410
        %456 = vmatpush.msra.mxu0 %v409
        %457 = vmatpush.msra.mxu0 %v408
        %458 = vmatpush.msra.mxu0 %v407
        %459 = vmatpush.msra.mxu0 %v406
        %460 = vmatpush.msra.mxu0 %v405
        %461 = vmatpush.msra.mxu0 %v404
        %462 = vmatpush.msra.mxu0 %v403
        %463 = vmatpush.msra.mxu0 %v402
        %464 = vmatpush.msra.mxu0 %v401
        %465 = vmatpush.msra.mxu0 %v400
        %466 = vmatpush.msra.mxu0 %v399
        %467 = vmatpush.msra.mxu0 %v398
        %468 = vmatpush.msra.mxu0 %v397
        %469 = vmatpush.msra.mxu0 %v396
        %470 = vmatpush.msra.mxu0 %v395
        %471 = vmatmul.f32.gmra.mxu0 %v361
        %v472 = vpop.f32.mrf.mxu0
        %v473 = vadd.f32 %v453, %v472
        %474 = vdwg.mxu0
        %vm475 = vcmask 1046528
        %v476 = vrot.slane %v349, 1
        %v477 = vrot.slane %v350, 1
        %v478 = vsel %vm475, %v476, %v477
        %v479 = vld [vmem:[#allocation5] sm:$0xff]
        %v480 = vld [vmem:[#allocation5 + $0x8] sm:$0xff]
        %v481 = vld [vmem:[#allocation5 + $0x10] sm:$0xff]
        %v482 = vld [vmem:[#allocation5 + $0x18] sm:$0xff]
        %v483 = vld [vmem:[#allocation5 + $0x20] sm:$0xff]
        %v484 = vld [vmem:[#allocation5 + $0x28] sm:$0xff]
        %v485 = vld [vmem:[#allocation5 + $0x30] sm:$0xff]
        %v486 = vld [vmem:[#allocation5 + $0x38] sm:$0xff]
        %v487 = vld [vmem:[#allocation5 + $0x40] sm:$0xff]
        %v488 = vld [vmem:[#allocation5 + $0x48] sm:$0xff]
        %v489 = vld [vmem:[#allocation5 + $0x50] sm:$0xff]
        %v490 = vld [vmem:[#allocation5 + $0x58] sm:$0xff]
        %v491 = vld [vmem:[#allocation5 + $0x60] sm:$0xff]
        %v492 = vld [vmem:[#allocation5 + $0x68] sm:$0xff]
        %v493 = vld [vmem:[#allocation5 + $0x70] sm:$0xff]
        %v494 = vld [vmem:[#allocation5 + $0x78] sm:$0xff]
        %v495 = vld [vmem:[#allocation5 + $0x80] sm:$0xff]
        %v496 = vld [vmem:[#allocation5 + $0x88] sm:$0xff]
        %v497 = vld [vmem:[#allocation5 + $0x90] sm:$0xff]
        %v498 = vld [vmem:[#allocation5 + $0x98] sm:$0xff]
        %v499 = vld [vmem:[#allocation5 + $0xa0] sm:$0xff]
        %v500 = vld [vmem:[#allocation5 + $0xa8] sm:$0xff]
        %v501 = vld [vmem:[#allocation5 + $0xb0] sm:$0xff]
        %v502 = vld [vmem:[#allocation5 + $0xb8] sm:$0xff]
        %v503 = vld [vmem:[#allocation5 + $0xc0] sm:$0xff]
        %v504 = vld [vmem:[#allocation5 + $0xc8] sm:$0xff]
        %v505 = vld [vmem:[#allocation5 + $0xd0] sm:$0xff]
        %v506 = vld [vmem:[#allocation5 + $0xd8] sm:$0xff]
        %v507 = vld [vmem:[#allocation5 + $0xe0] sm:$0xff]
        %v508 = vld [vmem:[#allocation5 + $0xe8] sm:$0xff]
        %v509 = vld [vmem:[#allocation5 + $0xf0] sm:$0xff]
        %v510 = vld [vmem:[#allocation5 + $0xf8] sm:$0xff]
        %v511 = vld [vmem:[#allocation5 + $0x100] sm:$0xff]
        %v512 = vld [vmem:[#allocation5 + $0x108] sm:$0xff]
        %v513 = vld [vmem:[#allocation5 + $0x110] sm:$0xff]
        %v514 = vld [vmem:[#allocation5 + $0x118] sm:$0xff]
        %v515 = vld [vmem:[#allocation5 + $0x120] sm:$0xff]
        %v516 = vld [vmem:[#allocation5 + $0x128] sm:$0xff]
        %v517 = vld [vmem:[#allocation5 + $0x130] sm:$0xff]
        %v518 = vld [vmem:[#allocation5 + $0x138] sm:$0xff]
        %v519 = vld [vmem:[#allocation5 + $0x140] sm:$0xff]
        %v520 = vld [vmem:[#allocation5 + $0x148] sm:$0xff]
        %v521 = vld [vmem:[#allocation5 + $0x150] sm:$0xff]
        %v522 = vld [vmem:[#allocation5 + $0x158] sm:$0xff]
        %v523 = vld [vmem:[#allocation5 + $0x160] sm:$0xff]
        %v524 = vld [vmem:[#allocation5 + $0x168] sm:$0xff]
        %v525 = vld [vmem:[#allocation5 + $0x170] sm:$0xff]
        %v526 = vld [vmem:[#allocation5 + $0x178] sm:$0xff]
        %v527 = vld [vmem:[%s4] sm:$0x1]
        %v529 = vperm.slane %v527, 0
        %v531 = vrot.slane %v478, 1
        %v532 = vrot.slane %v477, 1
        %v533 = vsel %vm475, %v531, %v532
        %v534 = vrot.slane %v356, 1
        %v535 = vrot.slane %v355, 1
        %v536 = vsel %vm475, %v534, %v535
        %540 = vmatpush.msra.mxu0 %v494
        %541 = vmatpush.msra.mxu0 %v493
        %542 = vmatpush.msra.mxu0 %v492
        %543 = vmatpush.msra.mxu0 %v491
        %544 = vmatpush.msra.mxu0 %v490
        %545 = vmatpush.msra.mxu0 %v489
        %546 = vmatpush.msra.mxu0 %v488
        %547 = vmatpush.msra.mxu0 %v487
        %548 = vmatpush.msra.mxu0 %v486
        %549 = vmatpush.msra.mxu0 %v485
        %550 = vmatpush.msra.mxu0 %v484
        %551 = vmatpush.msra.mxu0 %v483
        %552 = vmatpush.msra.mxu0 %v482
        %553 = vmatpush.msra.mxu0 %v481
        %554 = vmatpush.msra.mxu0 %v480
        %555 = vmatpush.msra.mxu0 %v479
        %556 = vmatmul.f32.gmra.mxu0 %v478
        %v557 = vpop.f32.mrf.mxu0
        %v558 = vadd.f32 %v529, %v557
        %559 = vdwg.mxu0
        %560 = vmatpush.msra.mxu0 %v510
        %561 = vmatpush.msra.mxu0 %v509
        %562 = vmatpush.msra.mxu0 %v508
        %563 = vmatpush.msra.mxu0 %v507
        %564 = vmatpush.msra.mxu0 %v506
        %565 = vmatpush.msra.mxu0 %v505
        %566 = vmatpush.msra.mxu0 %v504
        %567 = vmatpush.msra.mxu0 %v503
        %568 = vmatpush.msra.mxu0 %v502
        %569 = vmatpush.msra.mxu0 %v501
        %570 = vmatpush.msra.mxu0 %v500
        %571 = vmatpush.msra.mxu0 %v499
        %572 = vmatpush.msra.mxu0 %v498
        %573 = vmatpush.msra.mxu0 %v497
        %574 = vmatpush.msra.mxu0 %v496
        %575 = vmatpush.msra.mxu0 %v495
        %576 = vmatmul.f32.gmra.mxu0 %v533
        %v577 = vpop.f32.mrf.mxu0
        %v578 = vadd.f32 %v558, %v577
        %579 = vdwg.mxu0
        %580 = vmatpush.msra.mxu0 %v526
        %581 = vmatpush.msra.mxu0 %v525
        %582 = vmatpush.msra.mxu0 %v524
        %583 = vmatpush.msra.mxu0 %v523
        %584 = vmatpush.msra.mxu0 %v522
        %585 = vmatpush.msra.mxu0 %v521
        %586 = vmatpush.msra.mxu0 %v520
        %587 = vmatpush.msra.mxu0 %v519
        %588 = vmatpush.msra.mxu0 %v518
        %589 = vmatpush.msra.mxu0 %v517
        %590 = vmatpush.msra.mxu0 %v516
        %591 = vmatpush.msra.mxu0 %v515
        %592 = vmatpush.msra.mxu0 %v514
        %593 = vmatpush.msra.mxu0 %v513
        %594 = vmatpush.msra.mxu0 %v512
        %595 = vmatpush.msra.mxu0 %v511
        %596 = vmatmul.f32.gmra.mxu0 %v536
        %v597 = vpop.f32.mrf.mxu0
        %v598 = vadd.f32 %v578, %v597
        %599 = vdwg.mxu0
        %600 = vst [vmem:[%s327] sm:$0xff] %v473
        %601 = vst [vmem:[%s334] sm:$0xff] %v598
        %v602 = vrot.slane %v473, 4
        %v603 = vadd.f32 %v473, %v602
        %v604 = vrot.slane %v603, 2
        %v605 = vadd.f32 %v603, %v604
        %v606 = vrot.slane %v605, 1
        %v607 = vadd.f32 %v605, %v606
        %v608 = vmul.f32 %v473, %v473
        %v609 = vrot.slane %v608, 4
        %v610 = vadd.f32 %v608, %v609
        %v611 = vrot.slane %v610, 2
        %v612 = vadd.f32 %v610, %v611
        %v613 = vrot.slane %v612, 1
        %v614 = vadd.f32 %v612, %v613
        %vm615 = vcmask 1040384
        %v616 = vsel %vm615, %v607, %v614
        %617 = vst [vmem:[%s341] sm:$0x3] %v616
        %s618 = sand.u32 %s159, 1
        %s619 = scalar_lea.sflag [#allocation4], %s618
        %s620 = sand.u32 %s159, 1
        %s621 = smul.addr %s620, 8
        %s622 = scalar_lea.vmem [#allocation7], %s621
        %s623 = sand.u32 %s27, 1
        %s624 = scalar_lea.sflag [#allocation9], %s623
        %s625 = sand.u32 %s187, 1
        %s626 = smul.addr %s625, 8
        %s627 = scalar_lea.vmem [#allocation8], %s626
        %s628 = sand.u32 %s27, 1
        %s629 = scalar_lea.sflag [#allocation9], %s628
        %s630 = sand.u32 %s215, 1
        %s631 = smul.addr %s630, 2
        %s632 = scalar_lea.vmem [#allocation10], %s631
        // Predicated region
        $region49: #{tpu_custom_call.1} parent=39 // pred_check
          %p633 = pneg %p169
        $region50: #{tpu_custom_call.1} parent=39 // pred_check_branch
          %635 = sbr.rel (%p633) target = $region52
        $region51: #{tpu_custom_call.1} parent=39 // pred_region
          %637 = vsyncadd %s619, 0
          %s638 = smul.addr %s31, 2
          %s639 = sadd.s32 %s32, %s638
          %s640 = smul.addr %s639, 8
          %s641 = scalar_lea.hbm %s5, %s640
          %s643 = sshll.u32 %s622, 4
          %s644 = int_to_ptr.vmem [resolvable:$true] %s643
          %s645 = sshll.u32 %s641, 4
          %s646 = int_to_ptr.hbm [resolvable:$true] %s645
          %648 = dma.vmem_to_hbm [thread:$0]  %s644, 128, %s646, %s619
        $region52: #{tpu_custom_call.1} parent=39 // pred_fallthru
          _
        // Predicated region
        $region53: #{tpu_custom_call.1} parent=39 // pred_check
          %p649 = pneg %p197
        $region54: #{tpu_custom_call.1} parent=39 // pred_check_branch
          %651 = sbr.rel (%p649) target = $region56
        $region55: #{tpu_custom_call.1} parent=39 // pred_region
          %653 = vsyncadd %s624, 0
          %s654 = smul.addr %s31, 2
          %s655 = sadd.s32 %s32, %s654
          %s656 = smul.addr %s655, 8
          %s657 = scalar_lea.hbm %s6, %s656
          %s659 = sshll.u32 %s627, 4
          %s660 = int_to_ptr.vmem [resolvable:$true] %s659
          %s661 = sshll.u32 %s657, 4
          %s662 = int_to_ptr.hbm [resolvable:$true] %s661
          %664 = dma.vmem_to_hbm [thread:$0]  %s660, 128, %s662, %s624
        $region56: #{tpu_custom_call.1} parent=39 // pred_fallthru
          _
        // Predicated region
        $region57: #{tpu_custom_call.1} parent=39 // pred_check
          %p665 = pneg %p225
        $region58: #{tpu_custom_call.1} parent=39 // pred_check_branch
          %667 = sbr.rel (%p665) target = $region60
        $region59: #{tpu_custom_call.1} parent=39 // pred_region
          %669 = vsyncadd %s629, 0
          %s670 = smul.addr %s31, 2
          %s671 = sadd.s32 %s32, %s670
          %s672 = smul.addr %s671, 2
          %s673 = scalar_lea.hbm %s7, %s672
          %s675 = sshll.u32 %s632, 4
          %s676 = int_to_ptr.vmem [resolvable:$true] %s675
          %s677 = sshll.u32 %s673, 4
          %s678 = int_to_ptr.hbm [resolvable:$true] %s677
          %680 = dma.vmem_to_hbm [thread:$0]  %s676, 32, %s678, %s629
        $region60: #{tpu_custom_call.1} parent=39 // pred_fallthru
          _
      $region40: #{tpu_custom_call.1} parent=5 // pred_fallthru
        _
      %p681 = scmp.le.s32.totalorder 2, %s22
      // Predicated region
      $region61: #{tpu_custom_call.1} parent=5 // pred_check
        %p682 = pneg %p681
      $region62: #{tpu_custom_call.1} parent=5 // pred_check_branch
        %684 = sbr.rel (%p682) target = $region64
      $region63: #{tpu_custom_call.1} parent=5 // pred_region
        %s685 = ssub.s32 %s22, 2
        // Predicated region
        $region65: #{tpu_custom_call.1} parent=63 // pred_check
          %p686 = pneg %p175
        $region66: #{tpu_custom_call.1} parent=63 // pred_check_branch
          %688 = sbr.rel (%p686) target = $region68
        $region67: #{tpu_custom_call.1} parent=63 // pred_region
          %s689 = sand.u32 %s160, 1
          %s690 = scalar_lea.sflag [#allocation4], %s689
          %s691 = sand.u32 %s160, 1
          %s692 = smul.addr %s691, 8
          %s693 = scalar_lea.vmem [#allocation7], %s692
          %695 = dma.done %s690, 128
        $region68: #{tpu_custom_call.1} parent=63 // pred_fallthru
          _
        // Predicated region
        $region69: #{tpu_custom_call.1} parent=63 // pred_check
          %p696 = pneg %p203
        $region70: #{tpu_custom_call.1} parent=63 // pred_check_branch
          %698 = sbr.rel (%p696) target = $region72
        $region71: #{tpu_custom_call.1} parent=63 // pred_region
          %s699 = sand.u32 %s28, 1
          %s700 = scalar_lea.sflag [#allocation9], %s699
          %s701 = sand.u32 %s188, 1
          %s702 = smul.addr %s701, 8
          %s703 = scalar_lea.vmem [#allocation8], %s702
          %705 = dma.done %s700, 128
        $region72: #{tpu_custom_call.1} parent=63 // pred_fallthru
          _
        // Predicated region
        $region73: #{tpu_custom_call.1} parent=63 // pred_check
          %p706 = pneg %p231
        $region74: #{tpu_custom_call.1} parent=63 // pred_check_branch
          %708 = sbr.rel (%p706) target = $region76
        $region75: #{tpu_custom_call.1} parent=63 // pred_region
          %s709 = sand.u32 %s28, 1
          %s710 = scalar_lea.sflag [#allocation9], %s709
          %s711 = sand.u32 %s216, 1
          %s712 = smul.addr %s711, 2
          %s713 = scalar_lea.vmem [#allocation10], %s712
          %715 = dma.done %s710, 32
        $region76: #{tpu_custom_call.1} parent=63 // pred_fallthru
          _
      $region64: #{tpu_custom_call.1} parent=5 // pred_fallthru
        _
    $region6: #{tpu_custom_call.1} parent=1 // loop_footer
      %s26 = sadd.s32 1, %s22
    $region7: #{tpu_custom_call.1} parent=1 // loop_footer_branch
      %21 = sbr.rel target = $region3
    $region8: #{tpu_custom_call.1} parent=1 // loop_exit
      _
    %716 = vsyncpa [#allocation3], 1
    %s717 = scalar_lea.sflag [#allocation3], 1
    %718 = vsyncpa %s717, 1
    %719 = vsyncpa [#allocation6], 1
    %720 = vsyncpa [#allocation4], 1
    %s721 = scalar_lea.sflag [#allocation4], 1
    %722 = vsyncpa %s721, 1
    %723 = vsyncpa [#allocation9], 1
    %s724 = scalar_lea.sflag [#allocation9], 1
    %725 = vsyncpa %s724, 1

</llo_original>
